<compile_context>
chip_gen: v7x
topology: tpu7x:2x2x1
jax: 0.10.0
libtpu: 0.0.40
codegen_flags: <defaults>
</compile_context>

<pallas_src>
import functools

import jax
import jax.numpy as jnp
import numpy as np
from jax import lax
from jax.experimental import pallas as pl
from jax.experimental.pallas import tpu as pltpu


def _cbam_kernel(x_ref, w1t_ref, w2t_ref, opm_ref, opa_ref, bsp_ref, o_ref):
    """CBAM forward for one batch tile.

    x_ref   : (Bt, C, HW) VMEM  input, NCHW with spatial dims flattened (lane-dense)
    w1t_ref : (C, Cr)     VMEM  channel-MLP layer-1 weight, transposed
    w2t_ref : (Cr, C)     VMEM  channel-MLP layer-2 weight, transposed
    opm_ref : (HW, HW)    VMEM  banded conv operator for the channel-max map
    opa_ref : (HW, HW)    VMEM  banded conv operator for the channel-mean map
    bsp_ref : (1,)        SMEM  spatial conv bias
    o_ref   : (Bt, C, HW) VMEM  output
    """
    x = x_ref[...].astype(jnp.float32)                         # (Bt, C, HW)
    Bt, C, HW = x.shape

    # ---------------- channel attention (MXU) ----------------
    v_max = jnp.max(x, axis=2)                                 # (Bt, C)
    v_avg = jnp.sum(x, axis=2) * (1.0 / HW)                    # (Bt, C)
    # Fuse the two layer-1 matmuls by stacking along M (halves MXU pushes).
    v2 = jnp.concatenate([v_max, v_avg], axis=0)               # (2*Bt, C)
    h = jnp.maximum(
        jnp.dot(v2, w1t_ref[...], preferred_element_type=jnp.float32), 0.0)  # (2*Bt, Cr)
    h_sum = h[:Bt] + h[Bt:]                                    # (Bt, Cr)
    # Layer 2 is linear -> branches combine before the sigmoid (matches PyTorch).
    ca = jax.nn.sigmoid(
        jnp.dot(h_sum, w2t_ref[...], preferred_element_type=jnp.float32))    # (Bt, C)

    out = x * ca[:, :, None]                                   # (Bt, C, HW)

    # ---------------- spatial attention (flattened banded conv on MXU) -------
    sp_max = jnp.max(out, axis=1)                              # (Bt, HW)  max over channels
    sp_avg = jnp.sum(out, axis=1) * (1.0 / C)                  # (Bt, HW)  mean over channels
    logits = (jnp.dot(sp_max, opm_ref[...], preferred_element_type=jnp.float32)
              + jnp.dot(sp_avg, opa_ref[...], preferred_element_type=jnp.float32)
              + bsp_ref[0])                                    # bias folded into sigmoid arg
    sa = jax.nn.sigmoid(logits)                                # (Bt, HW)

    o_ref[...] = (out * sa[:, None, :] + x).astype(o_ref.dtype)   # residual add


def _build_flat_conv_operators(w_sp, H, W, K):
    """Precompute banded (HW, HW) operators for Conv2d(2->1, K, pad=K//2).

    conv_flat[b, ho*W + wo] = sum_i map_flat[b, i] * Op[i, ho*W + wo] summed
    over the two input channels (max / avg), where Op encodes both the KxK
    stencil and the zero padding.  Valid while HW is small (Op is HW^2 floats).
    """
    # TODO(synk): for large H*W (>~2K) switch back to a per-tap path; Op would
    # not fit VMEM there.
    P = K // 2
    wm = w_sp[0, 0].astype(jnp.float32)                        # (K, K) channel 0 = max map
    wa = w_sp[0, 1].astype(jnp.float32)                        # (K, K) channel 1 = avg map

    hi = jnp.arange(H)[:, None, None, None]                    # input row
    wi = jnp.arange(W)[None, :, None, None]                    # input col
    ho = jnp.arange(H)[None, None, :, None]                    # output row
    wo = jnp.arange(W)[None, None, None, :]                    # output col
    di = hi - ho + P
    dj = wi - wo + P
    valid = (di >= 0) & (di < K) & (dj >= 0) & (dj < K)        # (H, W, H, W)
    dic = jnp.clip(di, 0, K - 1)
    djc = jnp.clip(dj, 0, K - 1)
    op_max = jnp.where(valid, wm[dic, djc], 0.0).reshape(H * W, H * W)
    op_avg = jnp.where(valid, wa[dic, djc], 0.0).reshape(H * W, H * W)
    return op_max, op_avg


def cbam_forward(x_nchw, w1, w2, w_sp, b_sp, *, kernel_size=7):
    """CBAM block forward.  x_nchw: (B, C, H, W) float32 (PyTorch layout)."""
    B, C, H, W = x_nchw.shape
    Cr = w1.shape[0]
    HW = H * W

    # Free metadata reshape: NCHW -> (B, C, H*W); no transposes, lane-dense minor dim.
    x_flat = x_nchw.reshape(B, C, HW)
    w1t = jnp.transpose(w1).astype(jnp.float32)                # (C, Cr)
    w2t = jnp.transpose(w2).astype(jnp.float32)                # (Cr, C)
    op_max, op_avg = _build_flat_conv_operators(w_sp, H, W, kernel_size)
    bsp = b_sp.reshape(1).astype(jnp.float32)                  # (1,)

    # ------------- generation-aware batch tiling -------------
    try:
        dev_kind = jax.devices()[0].device_kind.lower()
    except Exception:  # pragma: no cover - defensive
        dev_kind = ""
    is_v7x = "v7" in dev_kind

    itemsize = jnp.dtype(x_flat.dtype).itemsize
    per_b = C * HW * itemsize                                  # bytes per batch element
    if is_v7x:
        # 2 TCs, 64 MiB VMEM: keep >=2 parallel grid steps, ~4 MiB tiles,
        # and leave headroom under the 64 MiB physical VMEM.
        target_bytes = 4 << 20
        min_steps = 2 if B >= 2 else 1
        vmem_cap = 48 << 20
    else:
        # v5e / v6e: single TC -> the grid is a serial loop; prefer one big
        # resident tile (amortizes per-step overhead) under 128 MiB VMEM.
        target_bytes = 12 << 20
        min_steps = 1
        vmem_cap = 100 << 20

    bt = max(1, min(B // min_steps, max(1, target_bytes // per_b)))
    # TODO(synk): for prime/odd B prefer padding + masked tail; this shrink can
    # degrade the tile size for awkward batch sizes.
    while B % bt:
        bt -= 1
    grid = (B // bt,)

    tile_bytes = bt * per_b
    aux_bytes = int((op_max.size + op_avg.size + w1t.size + w2t.size) * 4)
    vmem_limit = int(min(max(6 * tile_bytes + aux_bytes + (4 << 20), 32 << 20), vmem_cap))

    out_flat = pl.pallas_call(
        _cbam_kernel,
        out_shape=jax.ShapeDtypeStruct((B, C, HW), x_flat.dtype),
        grid=grid,
        in_specs=[
            pl.BlockSpec((bt, C, HW), lambda b: (b, 0, 0)),
            pl.BlockSpec((C, Cr), lambda b: (0, 0)),
            pl.BlockSpec((Cr, C), lambda b: (0, 0)),
            pl.BlockSpec((HW, HW), lambda b: (0, 0)),
            pl.BlockSpec((HW, HW), lambda b: (0, 0)),
            pl.BlockSpec(memory_space=pltpu.MemorySpace.SMEM),
        ],
        out_specs=pl.BlockSpec((bt, C, HW), lambda b: (b, 0, 0)),
        compiler_params=pltpu.CompilerParams(
            dimension_semantics=("parallel",),
            vmem_limit_bytes=vmem_limit,
        ),
    )(x_flat, w1t, w2t, op_max, op_avg, bsp)

    return out_flat.reshape(B, C, H, W)


def cbam_reference(x, w1, w2, w_sp, b_sp, *, kernel_size=7):
    """Pure-JAX reference matching the PyTorch module (NCHW)."""
    P = kernel_size // 2
    v_max = jnp.max(x, axis=(2, 3))
    v_avg = jnp.mean(x, axis=(2, 3))

    def mlp(v):
        return jnp.maximum(v @ w1.T, 0.0) @ w2.T

    ca = jax.nn.sigmoid(mlp(v_max) + mlp(v_avg))               # (B, C)
    out = x * ca[:, :, None, None]

    s_max = jnp.max(out, axis=1, keepdims=True)
    s_avg = jnp.mean(out, axis=1, keepdims=True)
    s_in = jnp.concatenate([s_max, s_avg], axis=1)             # (B, 2, H, W)
    conv = lax.conv_general_dilated(
        s_in, w_sp, (1, 1), [(P, P), (P, P)],
        dimension_numbers=("NCHW", "OIHW", "NCHW"))
    sa = jax.nn.sigmoid(conv + b_sp[0])                        # (B, 1, H, W)
    return out * sa + x


if __name__ == "__main__":
    # CBAMBlock(in_channels=32, reduction=16, kernel_size=7)
    B, C, H, W = 2, 32, 16, 16
    reduction, K = 16, 7
    Cr = C // reduction

    key = jax.random.PRNGKey(0)
    k1, k2, k3, k4, k5 = jax.random.split(key, 5)
    x = jax.random.normal(k1, (B, C, H, W), jnp.float32)
    w1 = jax.random.normal(k2, (Cr, C), jnp.float32) * 0.1         # Conv2d(C, C//r, 1, bias=False)
    w2 = jax.random.normal(k3, (C, Cr), jnp.float32) * 0.1         # Conv2d(C//r, C, 1, bias=False)
    w_sp = jax.random.normal(k4, (1, 2, K, K), jnp.float32) * 0.1  # Conv2d(2, 1, 7, padding=3)
    b_sp = jax.random.normal(k5, (1,), jnp.float32) * 0.1

    out = cbam_forward(x, w1, w2, w_sp, b_sp, kernel_size=K)
    jax.block_until_ready(out)

    ref = cbam_reference(x, w1, w2, w_sp, b_sp, kernel_size=K)
    # MXU matmuls run at default (bf16-pass) precision; tolerance accounts for that.
    np.testing.assert_allclose(np.asarray(out), np.asarray(ref), rtol=2e-2, atol=2e-2)
    print("KERNEL_OK")
</pallas_src>

<mosaic_0001>
module attributes {stable_mosaic.version = 11 : i64} {
  func.func @_cbam_kernel(%arg0: i32, %arg1: memref<2x32x256xf32, #tpu.memory_space<vmem>>, %arg2: memref<32x2xf32, #tpu.memory_space<vmem>>, %arg3: memref<2x32xf32, #tpu.memory_space<vmem>>, %arg4: memref<256x256xf32, #tpu.memory_space<vmem>>, %arg5: memref<256x256xf32, #tpu.memory_space<vmem>>, %arg6: memref<1xf32, #tpu.memory_space<smem>>, %arg7: memref<2x32x256xf32, #tpu.memory_space<vmem>>) attributes {dimension_semantics = [#tpu.dimension_semantics<parallel>], iteration_bounds = array<i64: 1>, scalar_prefetch = 0 : i64, scratch_operands = 0 : i64, tpu.core_type = #tpu.core_type<tc>, window_params = [{transform_indices = @transform_0, window_bounds = array<i64: 2, 32, 256>}, {pipeline_mode = #tpu.pipeline_mode<synchronous>, transform_indices = @transform_1, window_bounds = array<i64: 32, 2>}, {pipeline_mode = #tpu.pipeline_mode<synchronous>, transform_indices = @transform_2, window_bounds = array<i64: 2, 32>}, {pipeline_mode = #tpu.pipeline_mode<synchronous>, transform_indices = @transform_3, window_bounds = array<i64: 256, 256>}, {pipeline_mode = #tpu.pipeline_mode<synchronous>, transform_indices = @transform_4, window_bounds = array<i64: 256, 256>}, {transform_indices = @transform_5, window_bounds = array<i64: 1>}, {transform_indices = @transform_6, window_bounds = array<i64: 2, 32, 256>}]} {
    %c0 = arith.constant 0 : index
    %c0_0 = arith.constant 0 : index
    %c0_1 = arith.constant 0 : index
    %0 = vector.load %arg1[%c0, %c0_0, %c0_1] : memref<2x32x256xf32, #tpu.memory_space<vmem>>, vector<2x32x256xf32>
    %cst = arith.constant dense<0xFF800000> : vector<2x32xf32>
    %1 = vector.multi_reduction <maximumf>, %0, %cst [2] : vector<2x32x256xf32> to vector<2x32xf32>
    %cst_2 = arith.constant dense<0.000000e+00> : vector<2x32xf32>
    %2 = vector.multi_reduction <add>, %0, %cst_2 [2] : vector<2x32x256xf32> to vector<2x32xf32>
    %cst_3 = arith.constant 3.906250e-03 : f32
    %3 = vector.broadcast %cst_3 : f32 to vector<2x32xf32>
    %4 = arith.mulf %2, %3 : vector<2x32xf32>
    %5 = tpu.concatenate %1, %4 in 0 : vector<2x32xf32>, vector<2x32xf32> -> vector<4x32xf32>
    %c0_4 = arith.constant 0 : index
    %c0_5 = arith.constant 0 : index
    %6 = vector.load %arg2[%c0_4, %c0_5] : memref<32x2xf32, #tpu.memory_space<vmem>>, vector<32x2xf32>
    %cst_6 = arith.constant dense<0.000000e+00> : vector<4x2xf32>
    %7 = tpu.matmul %5, %6, %cst_6 {dimension_numbers = #tpu.dot_dimension_numbers<[1], [0], [0], [1], [0, 0, 1, 1], [], []>} : vector<4x32xf32>, vector<32x2xf32>, vector<4x2xf32> -> vector<4x2xf32>
    %cst_7 = arith.constant 0.000000e+00 : f32
    %8 = vector.broadcast %cst_7 : f32 to vector<4x2xf32>
    %9 = arith.maximumf %7, %8 : vector<4x2xf32>
    %10 = vector.extract_strided_slice %9 {offsets = [0, 0], sizes = [2, 2], strides = [1, 1]} : vector<4x2xf32> to vector<2x2xf32>
    %11 = vector.extract_strided_slice %9 {offsets = [2, 0], sizes = [2, 2], strides = [1, 1]} : vector<4x2xf32> to vector<2x2xf32>
    %12 = arith.addf %10, %11 : vector<2x2xf32>
    %c0_8 = arith.constant 0 : index
    %c0_9 = arith.constant 0 : index
    %13 = vector.load %arg3[%c0_8, %c0_9] : memref<2x32xf32, #tpu.memory_space<vmem>>, vector<2x32xf32>
    %cst_10 = arith.constant dense<0.000000e+00> : vector<2x32xf32>
    %14 = tpu.matmul %12, %13, %cst_10 {dimension_numbers = #tpu.dot_dimension_numbers<[1], [0], [0], [1], [0, 0, 1, 1], [], []>} : vector<2x2xf32>, vector<2x32xf32>, vector<2x32xf32> -> vector<2x32xf32>
    %15 = arith.negf %14 : vector<2x32xf32>
    %16 = math.exp %15 : vector<2x32xf32>
    %cst_11 = arith.constant 1.000000e+00 : f32
    %17 = vector.broadcast %cst_11 : f32 to vector<2x32xf32>
    %18 = arith.addf %17, %16 : vector<2x32xf32>
    %19 = arith.divf %17, %18 : vector<2x32xf32>
    %20 = vector.shape_cast %19 : vector<2x32xf32> to vector<2x32x1xf32>
    %21 = vector.broadcast %20 : vector<2x32x1xf32> to vector<2x32x256xf32>
    %22 = arith.mulf %0, %21 : vector<2x32x256xf32>
    %cst_12 = arith.constant dense<0xFF800000> : vector<2x256xf32>
    %23 = vector.multi_reduction <maximumf>, %22, %cst_12 [1] : vector<2x32x256xf32> to vector<2x256xf32>
    %cst_13 = arith.constant dense<0.000000e+00> : vector<2x256xf32>
    %24 = vector.multi_reduction <add>, %22, %cst_13 [1] : vector<2x32x256xf32> to vector<2x256xf32>
    %cst_14 = arith.constant 3.125000e-02 : f32
    %25 = vector.broadcast %cst_14 : f32 to vector<2x256xf32>
    %26 = arith.mulf %24, %25 : vector<2x256xf32>
    %c0_15 = arith.constant 0 : index
    %c0_16 = arith.constant 0 : index
    %27 = vector.load %arg4[%c0_15, %c0_16] : memref<256x256xf32, #tpu.memory_space<vmem>>, vector<256x256xf32>
    %cst_17 = arith.constant dense<0.000000e+00> : vector<2x256xf32>
    %28 = tpu.matmul %23, %27, %cst_17 {dimension_numbers = #tpu.dot_dimension_numbers<[1], [0], [0], [1], [0, 0, 1, 1], [], []>} : vector<2x256xf32>, vector<256x256xf32>, vector<2x256xf32> -> vector<2x256xf32>
    %c0_18 = arith.constant 0 : index
    %c0_19 = arith.constant 0 : index
    %29 = vector.load %arg5[%c0_18, %c0_19] : memref<256x256xf32, #tpu.memory_space<vmem>>, vector<256x256xf32>
    %cst_20 = arith.constant dense<0.000000e+00> : vector<2x256xf32>
    %30 = tpu.matmul %26, %29, %cst_20 {dimension_numbers = #tpu.dot_dimension_numbers<[1], [0], [0], [1], [0, 0, 1, 1], [], []>} : vector<2x256xf32>, vector<256x256xf32>, vector<2x256xf32> -> vector<2x256xf32>
    %31 = arith.addf %28, %30 : vector<2x256xf32>
    %c0_21 = arith.constant 0 : index
    %32 = memref.load %arg6[%c0_21] : memref<1xf32, #tpu.memory_space<smem>>
    %33 = vector.broadcast %32 : f32 to vector<2x256xf32>
    %34 = arith.addf %31, %33 : vector<2x256xf32>
    %35 = arith.negf %34 : vector<2x256xf32>
    %36 = math.exp %35 : vector<2x256xf32>
    %cst_22 = arith.constant 1.000000e+00 : f32
    %37 = vector.broadcast %cst_22 : f32 to vector<2x256xf32>
    %38 = arith.addf %37, %36 : vector<2x256xf32>
    %39 = arith.divf %37, %38 : vector<2x256xf32>
    %40 = vector.shape_cast %39 : vector<2x256xf32> to vector<2x1x256xf32>
    %41 = vector.broadcast %40 : vector<2x1x256xf32> to vector<2x32x256xf32>
    %42 = arith.mulf %22, %41 : vector<2x32x256xf32>
    %43 = arith.addf %42, %0 : vector<2x32x256xf32>
    %c0_23 = arith.constant 0 : index
    %c0_24 = arith.constant 0 : index
    %c0_25 = arith.constant 0 : index
    %44 = vector.load %arg7[%c0_23, %c0_24, %c0_25] : memref<2x32x256xf32, #tpu.memory_space<vmem>>, vector<2x32x256xf32>
    tpu.vector_store %arg7[%c0_23, %c0_24, %c0_25], %43 {strides = array<i32>} : memref<2x32x256xf32, #tpu.memory_space<vmem>>, vector<2x32x256xf32>,
    return
  }
  func.func @transform_0(%arg0: i32) -> (i32, i32, i32) {
    %c0_i32 = arith.constant 0 : i32
    %c0_i32_0 = arith.constant 0 : i32
    %c0_i32_1 = arith.constant 0 : i32
    return %arg0, %c0_i32, %c0_i32_0 : i32, i32, i32
  }
  func.func @transform_1(%arg0: i32) -> (i32, i32) {
    %c0_i32 = arith.constant 0 : i32
    %c0_i32_0 = arith.constant 0 : i32
    %c0_i32_1 = arith.constant 0 : i32
    return %c0_i32, %c0_i32_0 : i32, i32
  }
  func.func @transform_2(%arg0: i32) -> (i32, i32) {
    %c0_i32 = arith.constant 0 : i32
    %c0_i32_0 = arith.constant 0 : i32
    %c0_i32_1 = arith.constant 0 : i32
    return %c0_i32, %c0_i32_0 : i32, i32
  }
  func.func @transform_3(%arg0: i32) -> (i32, i32) {
    %c0_i32 = arith.constant 0 : i32
    %c0_i32_0 = arith.constant 0 : i32
    %c0_i32_1 = arith.constant 0 : i32
    return %c0_i32, %c0_i32_0 : i32, i32
  }
  func.func @transform_4(%arg0: i32) -> (i32, i32) {
    %c0_i32 = arith.constant 0 : i32
    %c0_i32_0 = arith.constant 0 : i32
    %c0_i32_1 = arith.constant 0 : i32
    return %c0_i32, %c0_i32_0 : i32, i32
  }
  func.func @transform_5(%arg0: i32) -> i32 {
    %c0_i32 = arith.constant 0 : i32
    %c0_i32_0 = arith.constant 0 : i32
    return %c0_i32 : i32
  }
  func.func @transform_6(%arg0: i32) -> (i32, i32, i32) {
    %c0_i32 = arith.constant 0 : i32
    %c0_i32_0 = arith.constant 0 : i32
    %c0_i32_1 = arith.constant 0 : i32
    return %arg0, %c0_i32, %c0_i32_0 : i32, i32, i32
  }
}

</mosaic_0001>

<llo_original>
// kernel: tpu_custom_call.1
$region0: #{tpu_custom_call.1}
  #allocation0 [shape = 'u32[]', space=smem, size = 0x4, offset = 0x4, fixed_abs, tag = 'smem constant byte address 0x4 - core index']
  #allocation1 [shape = 'u32[144,128]{1,0:T(1,128)}', space=vmem, size = 0x12000, scoped, tag = 'internal scratch']
  #allocation2 [shape = 'f32[1]{0:T(128)S(6)}', space=smem, size = 0x200, scoped, tag = 'scoped memory for tpu_custom_call.1']
  %s0 = inlined_call_operand.hbm [shape: f32[2,32,256], index: 0, kind: input, shape index: {}]
  %s1 = inlined_call_operand.vmem [shape: f32[32,2], index: 1, kind: input, shape index: {}]
  %s2 = inlined_call_operand.vmem [shape: f32[2,32], index: 2, kind: input, shape index: {}]
  %s3 = inlined_call_operand.hbm [shape: f32[256,256], index: 3, kind: input, shape index: {}]
  %s4 = inlined_call_operand.hbm [shape: f32[256,256], index: 4, kind: input, shape index: {}]
  %s5 = inlined_call_operand.<no memory space> [shape: f32[1], index: 5, kind: input, shape index: {}]
  %s6 = inlined_call_operand.hbm [shape: f32[2,32,256], index: 6, kind: output, shape index: {}]
  %s7 = sld [smem:[#allocation0]]
  $region46: #{tpu_custom_call.1} parent=0
    _
  %s9 = ssub.s32 1, %s7
  %s10 = scalar_select 0, %s9, %s7
  %11 = sst [smem:[#allocation2]] %s5
  $region1: #{tpu_custom_call.1} parent=0
    #allocation3 [shape = 'u8[65536]{0}', space=vmem, size = 0x10000, scoped, tag = 'input window, operand 0, single buffered']
    #allocation4 [shape = 's32[1]{0}', space=sflag, size = 0x4, scoped, tag = 'scoped memory for tpu_custom_call.1']
    #allocation5 [shape = 's32[1]{0}', space=sflag, size = 0x4, scoped, tag = 'scoped memory for tpu_custom_call.1']
    #allocation6 [shape = 'u8[262144]{0}', space=vmem, size = 0x40000, scoped, tag = 'input window, operand 3, single buffered']
    #allocation7 [shape = 's32[1]{0}', space=sflag, size = 0x4, scoped, tag = 'scoped memory for tpu_custom_call.1']
    #allocation8 [shape = 'u8[262144]{0}', space=vmem, size = 0x40000, scoped, tag = 'input window, operand 4, single buffered']
    #allocation9 [shape = 'u8[65536]{0}', space=vmem, size = 0x10000, scoped, tag = 'output window, operand 0, single buffered']
    %12 = vsyncpa [#allocation4], 0
    %13 = vsyncpa [#allocation7], 0
    %14 = vsyncpa [#allocation5], 0
    // Predicated region
    $region2: #{tpu_custom_call.1} parent=1 // pred_check
      _
    $region3: #{tpu_custom_call.1} parent=1 // pred_check_branch
      %16 = sbr.rel (0) target = $region5
    $region4: #{tpu_custom_call.1} parent=1 // pred_region
      %s18 = ssub.s32 2048, 2048
      %19 = vsyncadd [#allocation4], %s18
      %s20 = sshll.u32 [#allocation3], 4
      %s21 = int_to_ptr.vmem [resolvable:$true] %s20
      %26 = dma.hbm_to_vmem [thread:$0]  %s0, 2048, %s21, [#allocation4], 256, 256, 16
    $region5: #{tpu_custom_call.1} parent=1 // pred_fallthru
      _
    // Predicated region
    $region6: #{tpu_custom_call.1} parent=1 // pred_check
      _
    $region7: #{tpu_custom_call.1} parent=1 // pred_check_branch
      %28 = sbr.rel (0) target = $region9
    $region8: #{tpu_custom_call.1} parent=1 // pred_region
      _
    $region9: #{tpu_custom_call.1} parent=1 // pred_fallthru
      _
    // Predicated region
    $region10: #{tpu_custom_call.1} parent=1 // pred_check
      _
    $region11: #{tpu_custom_call.1} parent=1 // pred_check_branch
      %30 = sbr.rel (0) target = $region13
    $region12: #{tpu_custom_call.1} parent=1 // pred_region
      _
    $region13: #{tpu_custom_call.1} parent=1 // pred_fallthru
      _
    // Predicated region
    $region14: #{tpu_custom_call.1} parent=1 // pred_check
      _
    $region15: #{tpu_custom_call.1} parent=1 // pred_check_branch
      %32 = sbr.rel (0) target = $region17
    $region16: #{tpu_custom_call.1} parent=1 // pred_region
      %s34 = ssub.s32 8192, 8192
      %35 = vsyncadd [#allocation7], %s34
      %s36 = sshll.u32 [#allocation6], 4
      %s37 = int_to_ptr.vmem [resolvable:$true] %s36
      %42 = dma.hbm_to_vmem [thread:$0]  %s3, 8192, %s37, [#allocation7], 256, 256, 16
    $region17: #{tpu_custom_call.1} parent=1 // pred_fallthru
      _
    // Predicated region
    $region18: #{tpu_custom_call.1} parent=1 // pred_check
      _
    $region19: #{tpu_custom_call.1} parent=1 // pred_check_branch
      %44 = sbr.rel (0) target = $region21
    $region20: #{tpu_custom_call.1} parent=1 // pred_region
      %s46 = ssub.s32 8192, 8192
      %47 = vsyncadd [#allocation7], %s46
      %s48 = sshll.u32 [#allocation8], 4
      %s49 = int_to_ptr.vmem [resolvable:$true] %s48
      %54 = dma.hbm_to_vmem [thread:$0]  %s4, 8192, %s49, [#allocation7], 256, 256, 16
    $region21: #{tpu_custom_call.1} parent=1 // pred_fallthru
      _
    // Predicated region
    $region22: #{tpu_custom_call.1} parent=1 // pred_check
      _
    $region23: #{tpu_custom_call.1} parent=1 // pred_check_branch
      %56 = sbr.rel (0) target = $region25
    $region24: #{tpu_custom_call.1} parent=1 // pred_region
      _
    $region25: #{tpu_custom_call.1} parent=1 // pred_fallthru
      _
    // Predicated region
    $region26: #{tpu_custom_call.1} parent=1 // pred_check
      _
    $region27: #{tpu_custom_call.1} parent=1 // pred_check_branch
      %58 = sbr.rel (0) target = $region29
    $region28: #{tpu_custom_call.1} parent=1 // pred_region
      %59 = dma.done [#allocation4], 2048
    $region29: #{tpu_custom_call.1} parent=1 // pred_fallthru
      _
    // Predicated region
    $region30: #{tpu_custom_call.1} parent=1 // pred_check
      _
    $region31: #{tpu_custom_call.1} parent=1 // pred_check_branch
      %61 = sbr.rel (0) target = $region33
    $region32: #{tpu_custom_call.1} parent=1 // pred_region
      %62 = dma.done [#allocation7], 8192
    $region33: #{tpu_custom_call.1} parent=1 // pred_fallthru
      _
    // Predicated region
    $region34: #{tpu_custom_call.1} parent=1 // pred_check
      _
    $region35: #{tpu_custom_call.1} parent=1 // pred_check_branch
      %64 = sbr.rel (0) target = $region37
    $region36: #{tpu_custom_call.1} parent=1 // pred_region
      %65 = dma.done [#allocation7], 8192
    $region37: #{tpu_custom_call.1} parent=1 // pred_fallthru
      _
    %v66 = vld [vmem:[#allocation3] sm:$0xff]
    %v67 = vld [vmem:[#allocation3 + $0x8] sm:$0xff]
    %v68 = vld [vmem:[#allocation3 + $0x10] sm:$0xff]
    %v69 = vld [vmem:[#allocation3 + $0x18] sm:$0xff]
    %v70 = vld [vmem:[#allocation3 + $0x20] sm:$0xff]
    %v71 = vld [vmem:[#allocation3 + $0x28] sm:$0xff]
    %v72 = vld [vmem:[#allocation3 + $0x30] sm:$0xff]
    %v73 = vld [vmem:[#allocation3 + $0x38] sm:$0xff]
    %v74 = vld [vmem:[#allocation3 + $0x40] sm:$0xff]
    %v75 = vld [vmem:[#allocation3 + $0x48] sm:$0xff]
    %v76 = vld [vmem:[#allocation3 + $0x50] sm:$0xff]
    %v77 = vld [vmem:[#allocation3 + $0x58] sm:$0xff]
    %v78 = vld [vmem:[#allocation3 + $0x60] sm:$0xff]
    %v79 = vld [vmem:[#allocation3 + $0x68] sm:$0xff]
    %v80 = vld [vmem:[#allocation3 + $0x70] sm:$0xff]
    %v81 = vld [vmem:[#allocation3 + $0x78] sm:$0xff]
    %v82 = vmax.f32 %v66, %v67
    %83 = vmax.xlane.f32.xlu0 %v82
    %v84 = vpop.xlane.xlu0 %83
    %v85 = vmax.f32 %v68, %v69
    %86 = vmax.xlane.f32.xlu0 %v85
    %v87 = vpop.xlane.xlu0 %86
    %v88 = vmax.f32 %v70, %v71
    %89 = vmax.xlane.f32.xlu0 %v88
    %v90 = vpop.xlane.xlu0 %89
    %v91 = vmax.f32 %v72, %v73
    %92 = vmax.xlane.f32.xlu0 %v91
    %v93 = vpop.xlane.xlu0 %92
    %v94 = vmax.f32 %v74, %v75
    %95 = vmax.xlane.f32.xlu0 %v94
    %v96 = vpop.xlane.xlu0 %95
    %v97 = vmax.f32 %v76, %v77
    %98 = vmax.xlane.f32.xlu0 %v97
    %v99 = vpop.xlane.xlu0 %98
    %v100 = vmax.f32 %v78, %v79
    %101 = vmax.xlane.f32.xlu0 %v100
    %v102 = vpop.xlane.xlu0 %101
    %v103 = vmax.f32 %v80, %v81
    %104 = vmax.xlane.f32.xlu0 %v103
    %v105 = vpop.xlane.xlu0 %104
    %v106 = vadd.f32 %v66, %v67
    %107 = vadd.xlane.f32.xlu0 %v106
    %v108 = vpop.xlane.xlu0 %107
    %v109 = vadd.f32 %v68, %v69
    %110 = vadd.xlane.f32.xlu0 %v109
    %v111 = vpop.xlane.xlu0 %110
    %v112 = vadd.f32 %v70, %v71
    %113 = vadd.xlane.f32.xlu0 %v112
    %v114 = vpop.xlane.xlu0 %113
    %v115 = vadd.f32 %v72, %v73
    %116 = vadd.xlane.f32.xlu0 %v115
    %v117 = vpop.xlane.xlu0 %116
    %v118 = vadd.f32 %v74, %v75
    %119 = vadd.xlane.f32.xlu0 %v118
    %v120 = vpop.xlane.xlu0 %119
    %v121 = vadd.f32 %v76, %v77
    %122 = vadd.xlane.f32.xlu0 %v121
    %v123 = vpop.xlane.xlu0 %122
    %v124 = vadd.f32 %v78, %v79
    %125 = vadd.xlane.f32.xlu0 %v124
    %v126 = vpop.xlane.xlu0 %125
    %v127 = vadd.f32 %v80, %v81
    %128 = vadd.xlane.f32.xlu0 %v127
    %v129 = vpop.xlane.xlu0 %128
    %v130 = vmul.f32 %v108, 0.00390625
    %v131 = vmul.f32 %v111, 0.00390625
    %v132 = vmul.f32 %v114, 0.00390625
    %v133 = vmul.f32 %v117, 0.00390625
    %v134 = vmul.f32 %v120, 0.00390625
    %v135 = vmul.f32 %v123, 0.00390625
    %v136 = vmul.f32 %v126, 0.00390625
    %v137 = vmul.f32 %v129, 0.00390625
    %v146 = vlaneseq
    %v147 = vand.u32 %v146, 127
    %v148 = vlaneseq
    %v149 = vshrl.u32 %v148, 7
    %v150 = vsub.s32 %v147, %v149
    %v151 = vrot.slane %v84, %v150
    %v152 = vadd.s32 %v147, 4294967288
    %v153 = vlaneseq
    %v154 = vshrl.u32 %v153, 7
    %v155 = vsub.s32 %v152, %v154
    %v156 = vrot.slane %v87, %v155
    %vm157 = vcmask 130112
    %v158 = vsel %vm157, %v156, %v151
    %v159 = vadd.s32 %v147, 4294967280
    %v160 = vlaneseq
    %v161 = vshrl.u32 %v160, 7
    %v162 = vsub.s32 %v159, %v161
    %v163 = vrot.slane %v90, %v162
    %vm164 = vcmask 195712
    %v165 = vsel %vm164, %v163, %v158
    %v166 = vadd.s32 %v147, 4294967272
    %v167 = vlaneseq
    %v168 = vshrl.u32 %v167, 7
    %v169 = vsub.s32 %v166, %v168
    %v170 = vrot.slane %v93, %v169
    %vm171 = vcmask 261312
    %v172 = vsel %vm171, %v170, %v165
    %v173 = vlaneseq
    %v174 = vshrl.u32 %v173, 7
    %v175 = vsub.s32 %v147, %v174
    %v176 = vrot.slane %v96, %v175
    %v177 = vlaneseq
    %v178 = vshrl.u32 %v177, 7
    %v179 = vsub.s32 %v152, %v178
    %v180 = vrot.slane %v99, %v179
    %v181 = vsel %vm157, %v180, %v176
    %v182 = vlaneseq
    %v183 = vshrl.u32 %v182, 7
    %v184 = vsub.s32 %v159, %v183
    %v185 = vrot.slane %v102, %v184
    %v186 = vsel %vm164, %v185, %v181
    %v187 = vlaneseq
    %v188 = vshrl.u32 %v187, 7
    %v189 = vsub.s32 %v166, %v188
    %v190 = vrot.slane %v105, %v189
    %v191 = vsel %vm171, %v190, %v186
    %vm192 = vcmask 1041409
    %v193 = vsel %vm192, %v191, %v172
    %v203 = vlaneseq
    %v204 = vshrl.u32 %v203, 7
    %v205 = vsub.s32 %v147, %v204
    %v206 = vrot.slane %v130, %v205
    %v207 = vlaneseq
    %v208 = vshrl.u32 %v207, 7
    %v209 = vsub.s32 %v152, %v208
    %v210 = vrot.slane %v131, %v209
    %v211 = vsel %vm157, %v210, %v206
    %v212 = vlaneseq
    %v213 = vshrl.u32 %v212, 7
    %v214 = vsub.s32 %v159, %v213
    %v215 = vrot.slane %v132, %v214
    %v216 = vsel %vm164, %v215, %v211
    %v217 = vlaneseq
    %v218 = vshrl.u32 %v217, 7
    %v219 = vsub.s32 %v166, %v218
    %v220 = vrot.slane %v133, %v219
    %v221 = vsel %vm171, %v220, %v216
    %v222 = vlaneseq
    %v223 = vshrl.u32 %v222, 7
    %v224 = vsub.s32 %v147, %v223
    %v225 = vrot.slane %v134, %v224
    %v226 = vlaneseq
    %v227 = vshrl.u32 %v226, 7
    %v228 = vsub.s32 %v152, %v227
    %v229 = vrot.slane %v135, %v228
    %v230 = vsel %vm157, %v229, %v225
    %v231 = vlaneseq
    %v232 = vshrl.u32 %v231, 7
    %v233 = vsub.s32 %v159, %v232
    %v234 = vrot.slane %v136, %v233
    %v235 = vsel %vm164, %v234, %v230
    %v236 = vlaneseq
    %v237 = vshrl.u32 %v236, 7
    %v238 = vsub.s32 %v166, %v237
    %v239 = vrot.slane %v137, %v238
    %v240 = vsel %vm171, %v239, %v235
    %vm241 = vcmask 1043459
    %v242 = vsel %vm241, %v240, %v221
    %vm244 = vcmask 1041408
    %v245 = vsel %vm244, %v193, %v242
    %v246 = vld [vmem:[%s1] sm:$0xff]
    %v247 = vld [vmem:[%s1 + $0x8] sm:$0xff]
    %v248 = vld [vmem:[%s1 + $0x10] sm:$0xff]
    %v249 = vld [vmem:[%s1 + $0x18] sm:$0xff]
    %vm250 = vcmask 261120
    %v252 = vsel %vm250, %v245, 0
    %254 = vmatprep.subr.mxu0 0.0
    %255 = vmatpush1.msra.mxu0 %v246
    %256 = vmatprep.subr.mxu0 0.0
    %257 = vmatpush1.msra.mxu0 %v247
    %258 = vmatprep.subr.mxu0 0.0
    %259 = vmatpush1.msra.mxu0 %v248
    %260 = vmatprep.subr.mxu0 0.0
    %261 = vmatpush1.msra.mxu0 %v249
    %262 = vmatprep.subr.mxu0 0.0
    %263 = vmatpush1.msra.mxu0 0.0
    %264 = vmatprep.subr.mxu0 0.0
    %265 = vmatpush1.msra.mxu0 0.0
    %266 = vmatprep.subr.mxu0 0.0
    %267 = vmatpush1.msra.mxu0 0.0
    %268 = vmatprep.subr.mxu0 0.0
    %269 = vmatpush1.msra.mxu0 0.0
    %270 = vmatprep.subr.mxu0 0.0
    %271 = vmatpush1.msra.mxu0 0.0
    %272 = vmatprep.subr.mxu0 0.0
    %273 = vmatpush1.msra.mxu0 0.0
    %274 = vmatprep.subr.mxu0 0.0
    %275 = vmatpush1.msra.mxu0 0.0
    %276 = vmatprep.subr.mxu0 0.0
    %277 = vmatpush1.msra.mxu0 0.0
    %278 = vmatprep.subr.mxu0 0.0
    %279 = vmatpush1.msra.mxu0 0.0
    %280 = vmatprep.subr.mxu0 0.0
    %281 = vmatpush1.msra.mxu0 0.0
    %282 = vmatprep.subr.mxu0 0.0
    %283 = vmatpush1.msra.mxu0 0.0
    %284 = vmatprep.subr.mxu0 0.0
    %285 = vmatpush1.msra.mxu0 0.0
    %286 = vmatprep.subr.mxu0 0.0
    %287 = vmatpush1.msra.mxu0 0.0
    %288 = vmatprep.subr.mxu0 0.0
    %289 = vmatpush1.msra.mxu0 0.0
    %290 = vmatprep.subr.mxu0 0.0
    %291 = vmatpush1.msra.mxu0 0.0
    %292 = vmatprep.subr.mxu0 0.0
    %293 = vmatpush1.msra.mxu0 0.0
    %294 = vmatprep.subr.mxu0 0.0
    %295 = vmatpush1.msra.mxu0 0.0
    %296 = vmatprep.subr.mxu0 0.0
    %297 = vmatpush1.msra.mxu0 0.0
    %298 = vmatprep.subr.mxu0 0.0
    %299 = vmatpush1.msra.mxu0 0.0
    %300 = vmatprep.subr.mxu0 0.0
    %301 = vmatpush1.msra.mxu0 0.0
    %302 = vmatprep.subr.mxu0 0.0
    %303 = vmatpush1.msra.mxu0 0.0
    %304 = vmatprep.subr.mxu0 0.0
    %305 = vmatpush1.msra.mxu0 0.0
    %306 = vmatprep.subr.mxu0 0.0
    %307 = vmatpush1.msra.mxu0 0.0
    %308 = vmatprep.subr.mxu0 0.0
    %309 = vmatpush1.msra.mxu0 0.0
    %310 = vmatprep.subr.mxu0 0.0
    %311 = vmatpush1.msra.mxu0 0.0
    %312 = vmatprep.subr.mxu0 0.0
    %313 = vmatpush1.msra.mxu0 0.0
    %314 = vmatprep.subr.mxu0 0.0
    %315 = vmatpush1.msra.mxu0 0.0
    %316 = vmatprep.subr.mxu0 0.0
    %317 = vmatpush1.msra.mxu0 0.0
    %318 = vmatprep.mubr.f32.mxu0 0.0
    %319 = vmatmul.mubr.f32.gmra.mrb[0].mxu0 %v252
    %v320 = vpop.f32.mrb[0].mxu0
    %v321 = vadd.f32 0.0, %v320
    %v322 = vpop.f32.mrb[0].mxu0
    %323 = vdwg.mxu0
    %v324 = vmax.f32 %v321, 0.0
    %v326 = vrot.slane %v324, 2
    %v328 = vadd.f32 %v324, %v326
    %v329 = vld [vmem:[%s2] sm:$0x3]
    %vm330 = vcmask 15360
    %v332 = vsel %vm330, %v328, 0
    %v335 = vsel %vm244, %v329, 0
    %337 = vmatprep.subr.mxu0 0.0
    %338 = vmatpush1.msra.mxu0 %v335
    %339 = vmatprep.subr.mxu0 0.0
    %340 = vmatpush1.msra.mxu0 0.0
    %341 = vmatprep.subr.mxu0 0.0
    %342 = vmatpush1.msra.mxu0 0.0
    %343 = vmatprep.subr.mxu0 0.0
    %344 = vmatpush1.msra.mxu0 0.0
    %345 = vmatprep.subr.mxu0 0.0
    %346 = vmatpush1.msra.mxu0 0.0
    %347 = vmatprep.subr.mxu0 0.0
    %348 = vmatpush1.msra.mxu0 0.0
    %349 = vmatprep.subr.mxu0 0.0
    %350 = vmatpush1.msra.mxu0 0.0
    %351 = vmatprep.subr.mxu0 0.0
    %352 = vmatpush1.msra.mxu0 0.0
    %353 = vmatprep.subr.mxu0 0.0
    %354 = vmatpush1.msra.mxu0 0.0
    %355 = vmatprep.subr.mxu0 0.0
    %356 = vmatpush1.msra.mxu0 0.0
    %357 = vmatprep.subr.mxu0 0.0
    %358 = vmatpush1.msra.mxu0 0.0
    %359 = vmatprep.subr.mxu0 0.0
    %360 = vmatpush1.msra.mxu0 0.0
    %361 = vmatprep.subr.mxu0 0.0
    %362 = vmatpush1.msra.mxu0 0.0
    %363 = vmatprep.subr.mxu0 0.0
    %364 = vmatpush1.msra.mxu0 0.0
    %365 = vmatprep.subr.mxu0 0.0
    %366 = vmatpush1.msra.mxu0 0.0
    %367 = vmatprep.subr.mxu0 0.0
    %368 = vmatpush1.msra.mxu0 0.0
    %369 = vmatprep.subr.mxu0 0.0
    %370 = vmatpush1.msra.mxu0 0.0
    %371 = vmatprep.subr.mxu0 0.0
    %372 = vmatpush1.msra.mxu0 0.0
    %373 = vmatprep.subr.mxu0 0.0
    %374 = vmatpush1.msra.mxu0 0.0
    %375 = vmatprep.subr.mxu0 0.0
    %376 = vmatpush1.msra.mxu0 0.0
    %377 = vmatprep.subr.mxu0 0.0
    %378 = vmatpush1.msra.mxu0 0.0
    %379 = vmatprep.subr.mxu0 0.0
    %380 = vmatpush1.msra.mxu0 0.0
    %381 = vmatprep.subr.mxu0 0.0
    %382 = vmatpush1.msra.mxu0 0.0
    %383 = vmatprep.subr.mxu0 0.0
    %384 = vmatpush1.msra.mxu0 0.0
    %385 = vmatprep.subr.mxu0 0.0
    %386 = vmatpush1.msra.mxu0 0.0
    %387 = vmatprep.subr.mxu0 0.0
    %388 = vmatpush1.msra.mxu0 0.0
    %389 = vmatprep.subr.mxu0 0.0
    %390 = vmatpush1.msra.mxu0 0.0
    %391 = vmatprep.subr.mxu0 0.0
    %392 = vmatpush1.msra.mxu0 0.0
    %393 = vmatprep.subr.mxu0 0.0
    %394 = vmatpush1.msra.mxu0 0.0
    %395 = vmatprep.subr.mxu0 0.0
    %396 = vmatpush1.msra.mxu0 0.0
    %397 = vmatprep.subr.mxu0 0.0
    %398 = vmatpush1.msra.mxu0 0.0
    %399 = vmatprep.subr.mxu0 0.0
    %400 = vmatpush1.msra.mxu0 0.0
    %401 = vmatprep.mubr.f32.mxu0 0.0
    %402 = vmatmul.mubr.f32.gmra.mrb[0].mxu0 %v332
    %v403 = vpop.f32.mrb[0].mxu0
    %v404 = vadd.f32 0.0, %v403
    %v405 = vpop.f32.mrb[0].mxu0
    %406 = vdwg.mxu0
    %v407 = vxor.u32 %v404, 2147483648
    %v408 = vmul.f32 %v407, 1.442695
    %v409 = vpow.pop %v408
    %v410 = vadd.f32 %v409, 1.0
    %v411 = vrcp.pop %v410
    %v412 = vmul.f32 1.0, %v411
    %v413 = vlaneseq
    %v414 = vshrl.u32 %v413, 7
    %v415 = vsub.s32 0, %v414
    %v416 = vrot.slane %v412, %v415
    %418 = vbcast.lane.b32.xlu0 %v416, 256
    %v419 = vpop.permute.xlu0 %418
    %s421 = sor.u32 256, 8
    %422 = vbcast.lane.b32.xlu0 %v416, %s421
    %v423 = vpop.permute.xlu0 %422
    %s425 = sor.u32 256, 16
    %426 = vbcast.lane.b32.xlu0 %v416, %s425
    %v427 = vpop.permute.xlu0 %426
    %s429 = sor.u32 256, 24
    %430 = vbcast.lane.b32.xlu0 %v416, %s429
    %v431 = vpop.permute.xlu0 %430
    %v432 = vlaneseq
    %v433 = vshrl.u32 %v432, 7
    %v434 = vsub.s32 1, %v433
    %v435 = vrot.slane %v412, %v434
    %437 = vbcast.lane.b32.xlu0 %v435, 256
    %v438 = vpop.permute.xlu0 %437
    %s440 = sor.u32 256, 8
    %441 = vbcast.lane.b32.xlu0 %v435, %s440
    %v442 = vpop.permute.xlu0 %441
    %s444 = sor.u32 256, 16
    %445 = vbcast.lane.b32.xlu0 %v435, %s444
    %v446 = vpop.permute.xlu0 %445
    %s448 = sor.u32 256, 24
    %449 = vbcast.lane.b32.xlu0 %v435, %s448
    %v450 = vpop.permute.xlu0 %449
    %v451 = vmul.f32 %v66, %v419
    %v452 = vmul.f32 %v67, %v419
    %v453 = vmul.f32 %v68, %v423
    %v454 = vmul.f32 %v69, %v423
    %v455 = vmul.f32 %v70, %v427
    %v456 = vmul.f32 %v71, %v427
    %v457 = vmul.f32 %v72, %v431
    %v458 = vmul.f32 %v73, %v431
    %v459 = vmul.f32 %v74, %v438
    %v460 = vmul.f32 %v75, %v438
    %v461 = vmul.f32 %v76, %v442
    %v462 = vmul.f32 %v77, %v442
    %v463 = vmul.f32 %v78, %v446
    %v464 = vmul.f32 %v79, %v446
    %v465 = vmul.f32 %v80, %v450
    %v466 = vmul.f32 %v81, %v450
    %v467 = vmax.f32 %v451, %v453
    %v468 = vmax.f32 %v467, %v455
    %v469 = vmax.f32 %v468, %v457
    %v470 = vrot.slane %v469, 4
    %v471 = vmax.f32 %v469, %v470
    %v472 = vrot.slane %v471, 2
    %v473 = vmax.f32 %v471, %v472
    %v474 = vrot.slane %v473, 1
    %v475 = vmax.f32 %v473, %v474
    %v476 = vmax.f32 %v452, %v454
    %v477 = vmax.f32 %v476, %v456
    %v478 = vmax.f32 %v477, %v458
    %v479 = vrot.slane %v478, 4
    %v480 = vmax.f32 %v478, %v479
    %v481 = vrot.slane %v480, 2
    %v482 = vmax.f32 %v480, %v481
    %v483 = vrot.slane %v482, 1
    %v484 = vmax.f32 %v482, %v483
    %v485 = vmax.f32 %v459, %v461
    %v486 = vmax.f32 %v485, %v463
    %v487 = vmax.f32 %v486, %v465
    %v488 = vrot.slane %v487, 4
    %v489 = vmax.f32 %v487, %v488
    %v490 = vrot.slane %v489, 2
    %v491 = vmax.f32 %v489, %v490
    %v492 = vrot.slane %v491, 1
    %v493 = vmax.f32 %v491, %v492
    %v494 = vmax.f32 %v460, %v462
    %v495 = vmax.f32 %v494, %v464
    %v496 = vmax.f32 %v495, %v466
    %v497 = vrot.slane %v496, 4
    %v498 = vmax.f32 %v496, %v497
    %v499 = vrot.slane %v498, 2
    %v500 = vmax.f32 %v498, %v499
    %v501 = vrot.slane %v500, 1
    %v502 = vmax.f32 %v500, %v501
    %v503 = vadd.f32 %v451, %v453
    %v504 = vadd.f32 %v503, %v455
    %v505 = vadd.f32 %v504, %v457
    %v506 = vrot.slane %v505, 4
    %v507 = vadd.f32 %v505, %v506
    %v508 = vrot.slane %v507, 2
    %v509 = vadd.f32 %v507, %v508
    %v510 = vrot.slane %v509, 1
    %v511 = vadd.f32 %v509, %v510
    %v512 = vadd.f32 %v452, %v454
    %v513 = vadd.f32 %v512, %v456
    %v514 = vadd.f32 %v513, %v458
    %v515 = vrot.slane %v514, 4
    %v516 = vadd.f32 %v514, %v515
    %v517 = vrot.slane %v516, 2
    %v518 = vadd.f32 %v516, %v517
    %v519 = vrot.slane %v518, 1
    %v520 = vadd.f32 %v518, %v519
    %v521 = vadd.f32 %v459, %v461
    %v522 = vadd.f32 %v521, %v463
    %v523 = vadd.f32 %v522, %v465
    %v524 = vrot.slane %v523, 4
    %v525 = vadd.f32 %v523, %v524
    %v526 = vrot.slane %v525, 2
    %v527 = vadd.f32 %v525, %v526
    %v528 = vrot.slane %v527, 1
    %v529 = vadd.f32 %v527, %v528
    %v530 = vadd.f32 %v460, %v462
    %v531 = vadd.f32 %v530, %v464
    %v532 = vadd.f32 %v531, %v466
    %v533 = vrot.slane %v532, 4
    %v534 = vadd.f32 %v532, %v533
    %v535 = vrot.slane %v534, 2
    %v536 = vadd.f32 %v534, %v535
    %v537 = vrot.slane %v536, 1
    %v538 = vadd.f32 %v536, %v537
    %v539 = vmul.f32 %v511, 0.03125
    %v540 = vmul.f32 %v520, 0.03125
    %v541 = vmul.f32 %v529, 0.03125
    %v542 = vmul.f32 %v538, 0.03125
    %v543 = vld [vmem:[#allocation6] sm:$0xff]
    %v544 = vld [vmem:[#allocation6 + $0x8] sm:$0xff]
    %v545 = vld [vmem:[#allocation6 + $0x10] sm:$0xff]
    %v546 = vld [vmem:[#allocation6 + $0x18] sm:$0xff]
    %v547 = vld [vmem:[#allocation6 + $0x20] sm:$0xff]
    %v548 = vld [vmem:[#allocation6 + $0x28] sm:$0xff]
    %v549 = vld [vmem:[#allocation6 + $0x30] sm:$0xff]
    %v550 = vld [vmem:[#allocation6 + $0x38] sm:$0xff]
    %v551 = vld [vmem:[#allocation6 + $0x40] sm:$0xff]
    %v552 = vld [vmem:[#allocation6 + $0x48] sm:$0xff]
    %v553 = vld [vmem:[#allocation6 + $0x50] sm:$0xff]
    %v554 = vld [vmem:[#allocation6 + $0x58] sm:$0xff]
    %v555 = vld [vmem:[#allocation6 + $0x60] sm:$0xff]
    %v556 = vld [vmem:[#allocation6 + $0x68] sm:$0xff]
    %v557 = vld [vmem:[#allocation6 + $0x70] sm:$0xff]
    %v558 = vld [vmem:[#allocation6 + $0x78] sm:$0xff]
    %v559 = vld [vmem:[#allocation6 + $0x80] sm:$0xff]
    %v560 = vld [vmem:[#allocation6 + $0x88] sm:$0xff]
    %v561 = vld [vmem:[#allocation6 + $0x90] sm:$0xff]
    %v562 = vld [vmem:[#allocation6 + $0x98] sm:$0xff]
    %v563 = vld [vmem:[#allocation6 + $0xa0] sm:$0xff]
    %v564 = vld [vmem:[#allocation6 + $0xa8] sm:$0xff]
    %v565 = vld [vmem:[#allocation6 + $0xb0] sm:$0xff]
    %v566 = vld [vmem:[#allocation6 + $0xb8] sm:$0xff]
    %v567 = vld [vmem:[#allocation6 + $0xc0] sm:$0xff]
    %v568 = vld [vmem:[#allocation6 + $0xc8] sm:$0xff]
    %v569 = vld [vmem:[#allocation6 + $0xd0] sm:$0xff]
    %v570 = vld [vmem:[#allocation6 + $0xd8] sm:$0xff]
    %v571 = vld [vmem:[#allocation6 + $0xe0] sm:$0xff]
    %v572 = vld [vmem:[#allocation6 + $0xe8] sm:$0xff]
    %v573 = vld [vmem:[#allocation6 + $0xf0] sm:$0xff]
    %v574 = vld [vmem:[#allocation6 + $0xf8] sm:$0xff]
    %v575 = vld [vmem:[#allocation6 + $0x100] sm:$0xff]
    %v576 = vld [vmem:[#allocation6 + $0x108] sm:$0xff]
    %v577 = vld [vmem:[#allocation6 + $0x110] sm:$0xff]
    %v578 = vld [vmem:[#allocation6 + $0x118] sm:$0xff]
    %v579 = vld [vmem:[#allocation6 + $0x120] sm:$0xff]
    %v580 = vld [vmem:[#allocation6 + $0x128] sm:$0xff]
    %v581 = vld [vmem:[#allocation6 + $0x130] sm:$0xff]
    %v582 = vld [vmem:[#allocation6 + $0x138] sm:$0xff]
    %v583 = vld [vmem:[#allocation6 + $0x140] sm:$0xff]
    %v584 = vld [vmem:[#allocation6 + $0x148] sm:$0xff]
    %v585 = vld [vmem:[#allocation6 + $0x150] sm:$0xff]
    %v586 = vld [vmem:[#allocation6 + $0x158] sm:$0xff]
    %v587 = vld [vmem:[#allocation6 + $0x160] sm:$0xff]
    %v588 = vld [vmem:[#allocation6 + $0x168] sm:$0xff]
    %v589 = vld [vmem:[#allocation6 + $0x170] sm:$0xff]
    %v590 = vld [vmem:[#allocation6 + $0x178] sm:$0xff]
    %v591 = vld [vmem:[#allocation6 + $0x180] sm:$0xff]
    %v592 = vld [vmem:[#allocation6 + $0x188] sm:$0xff]
    %v593 = vld [vmem:[#allocation6 + $0x190] sm:$0xff]
    %v594 = vld [vmem:[#allocation6 + $0x198] sm:$0xff]
    %v595 = vld [vmem:[#allocation6 + $0x1a0] sm:$0xff]
    %v596 = vld [vmem:[#allocation6 + $0x1a8] sm:$0xff]
    %v597 = vld [vmem:[#allocation6 + $0x1b0] sm:$0xff]
    %v598 = vld [vmem:[#allocation6 + $0x1b8] sm:$0xff]
    %v599 = vld [vmem:[#allocation6 + $0x1c0] sm:$0xff]
    %v600 = vld [vmem:[#allocation6 + $0x1c8] sm:$0xff]
    %v601 = vld [vmem:[#allocation6 + $0x1d0] sm:$0xff]
    %v602 = vld [vmem:[#allocation6 + $0x1d8] sm:$0xff]
    %v603 = vld [vmem:[#allocation6 + $0x1e0] sm:$0xff]
    %v604 = vld [vmem:[#allocation6 + $0x1e8] sm:$0xff]
    %v605 = vld [vmem:[#allocation6 + $0x1f0] sm:$0xff]
    %v606 = vld [vmem:[#allocation6 + $0x1f8] sm:$0xff]
    %v607 = vld [vmem:[#allocation8] sm:$0xff]
    %v608 = vld [vmem:[#allocation8 + $0x8] sm:$0xff]
    %v609 = vld [vmem:[#allocation8 + $0x10] sm:$0xff]
    %v610 = vld [vmem:[#allocation8 + $0x18] sm:$0xff]
    %v611 = vld [vmem:[#allocation8 + $0x20] sm:$0xff]
    %v612 = vld [vmem:[#allocation8 + $0x28] sm:$0xff]
    %v613 = vld [vmem:[#allocation8 + $0x30] sm:$0xff]
    %v614 = vld [vmem:[#allocation8 + $0x38] sm:$0xff]
    %v615 = vld [vmem:[#allocation8 + $0x40] sm:$0xff]
    %v616 = vld [vmem:[#allocation8 + $0x48] sm:$0xff]
    %v617 = vld [vmem:[#allocation8 + $0x50] sm:$0xff]
    %v618 = vld [vmem:[#allocation8 + $0x58] sm:$0xff]
    %v619 = vld [vmem:[#allocation8 + $0x60] sm:$0xff]
    %v620 = vld [vmem:[#allocation8 + $0x68] sm:$0xff]
    %v621 = vld [vmem:[#allocation8 + $0x70] sm:$0xff]
    %v622 = vld [vmem:[#allocation8 + $0x78] sm:$0xff]
    %v623 = vld [vmem:[#allocation8 + $0x80] sm:$0xff]
    %v624 = vld [vmem:[#allocation8 + $0x88] sm:$0xff]
    %v625 = vld [vmem:[#allocation8 + $0x90] sm:$0xff]
    %v626 = vld [vmem:[#allocation8 + $0x98] sm:$0xff]
    %v627 = vld [vmem:[#allocation8 + $0xa0] sm:$0xff]
    %v628 = vld [vmem:[#allocation8 + $0xa8] sm:$0xff]
    %v629 = vld [vmem:[#allocation8 + $0xb0] sm:$0xff]
    %v630 = vld [vmem:[#allocation8 + $0xb8] sm:$0xff]
    %v631 = vld [vmem:[#allocation8 + $0xc0] sm:$0xff]
    %v632 = vld [vmem:[#allocation8 + $0xc8] sm:$0xff]
    %v633 = vld [vmem:[#allocation8 + $0xd0] sm:$0xff]
    %v634 = vld [vmem:[#allocation8 + $0xd8] sm:$0xff]
    %v635 = vld [vmem:[#allocation8 + $0xe0] sm:$0xff]
    %v636 = vld [vmem:[#allocation8 + $0xe8] sm:$0xff]
    %v637 = vld [vmem:[#allocation8 + $0xf0] sm:$0xff]
    %v638 = vld [vmem:[#allocation8 + $0xf8] sm:$0xff]
    %v639 = vld [vmem:[#allocation8 + $0x100] sm:$0xff]
    %v640 = vld [vmem:[#allocation8 + $0x108] sm:$0xff]
    %v641 = vld [vmem:[#allocation8 + $0x110] sm:$0xff]
    %v642 = vld [vmem:[#allocation8 + $0x118] sm:$0xff]
    %v643 = vld [vmem:[#allocation8 + $0x120] sm:$0xff]
    %v644 = vld [vmem:[#allocation8 + $0x128] sm:$0xff]
    %v645 = vld [vmem:[#allocation8 + $0x130] sm:$0xff]
    %v646 = vld [vmem:[#allocation8 + $0x138] sm:$0xff]
    %v647 = vld [vmem:[#allocation8 + $0x140] sm:$0xff]
    %v648 = vld [vmem:[#allocation8 + $0x148] sm:$0xff]
    %v649 = vld [vmem:[#allocation8 + $0x150] sm:$0xff]
    %v650 = vld [vmem:[#allocation8 + $0x158] sm:$0xff]
    %v651 = vld [vmem:[#allocation8 + $0x160] sm:$0xff]
    %v652 = vld [vmem:[#allocation8 + $0x168] sm:$0xff]
    %v653 = vld [vmem:[#allocation8 + $0x170] sm:$0xff]
    %v654 = vld [vmem:[#allocation8 + $0x178] sm:$0xff]
    %v655 = vld [vmem:[#allocation8 + $0x180] sm:$0xff]
    %v656 = vld [vmem:[#allocation8 + $0x188] sm:$0xff]
    %v657 = vld [vmem:[#allocation8 + $0x190] sm:$0xff]
    %v658 = vld [vmem:[#allocation8 + $0x198] sm:$0xff]
    %v659 = vld [vmem:[#allocation8 + $0x1a0] sm:$0xff]
    %v660 = vld [vmem:[#allocation8 + $0x1a8] sm:$0xff]
    %v661 = vld [vmem:[#allocation8 + $0x1b0] sm:$0xff]
    %v662 = vld [vmem:[#allocation8 + $0x1b8] sm:$0xff]
    %v663 = vld [vmem:[#allocation8 + $0x1c0] sm:$0xff]
    %v664 = vld [vmem:[#allocation8 + $0x1c8] sm:$0xff]
    %v665 = vld [vmem:[#allocation8 + $0x1d0] sm:$0xff]
    %v666 = vld [vmem:[#allocation8 + $0x1d8] sm:$0xff]
    %v667 = vld [vmem:[#allocation8 + $0x1e0] sm:$0xff]
    %v668 = vld [vmem:[#allocation8 + $0x1e8] sm:$0xff]
    %v669 = vld [vmem:[#allocation8 + $0x1f0] sm:$0xff]
    %v670 = vld [vmem:[#allocation8 + $0x1f8] sm:$0xff]
    %v675 = vsel %vm192, %v541, %v539
    %v676 = vsel %vm192, %v542, %v540
    %679 = vmatprep.subr.mxu0 %v608
    %680 = vmatpush1.msra.mxu0 %v607
    %681 = vmatprep.subr.mxu0 %v610
    %682 = vmatpush1.msra.mxu0 %v609
    %683 = vmatprep.subr.mxu0 %v612
    %684 = vmatpush1.msra.mxu0 %v611
    %685 = vmatprep.subr.mxu0 %v614
    %686 = vmatpush1.msra.mxu0 %v613
    %687 = vmatprep.subr.mxu0 %v616
    %688 = vmatpush1.msra.mxu0 %v615
    %689 = vmatprep.subr.mxu0 %v618
    %690 = vmatpush1.msra.mxu0 %v617
    %691 = vmatprep.subr.mxu0 %v620
    %692 = vmatpush1.msra.mxu0 %v619
    %693 = vmatprep.subr.mxu0 %v622
    %694 = vmatpush1.msra.mxu0 %v621
    %695 = vmatprep.subr.mxu0 %v624
    %696 = vmatpush1.msra.mxu0 %v623
    %697 = vmatprep.subr.mxu0 %v626
    %698 = vmatpush1.msra.mxu0 %v625
    %699 = vmatprep.subr.mxu0 %v628
    %700 = vmatpush1.msra.mxu0 %v627
    %701 = vmatprep.subr.mxu0 %v630
    %702 = vmatpush1.msra.mxu0 %v629
    %703 = vmatprep.subr.mxu0 %v632
    %704 = vmatpush1.msra.mxu0 %v631
    %705 = vmatprep.subr.mxu0 %v634
    %706 = vmatpush1.msra.mxu0 %v633
    %707 = vmatprep.subr.mxu0 %v636
    %708 = vmatpush1.msra.mxu0 %v635
    %709 = vmatprep.subr.mxu0 %v638
    %710 = vmatpush1.msra.mxu0 %v637
    %711 = vmatprep.subr.mxu0 %v640
    %712 = vmatpush1.msra.mxu0 %v639
    %713 = vmatprep.subr.mxu0 %v642
    %714 = vmatpush1.msra.mxu0 %v641
    %715 = vmatprep.subr.mxu0 %v644
    %716 = vmatpush1.msra.mxu0 %v643
    %717 = vmatprep.subr.mxu0 %v646
    %718 = vmatpush1.msra.mxu0 %v645
    %719 = vmatprep.subr.mxu0 %v648
    %720 = vmatpush1.msra.mxu0 %v647
    %721 = vmatprep.subr.mxu0 %v650
    %722 = vmatpush1.msra.mxu0 %v649
    %723 = vmatprep.subr.mxu0 %v652
    %724 = vmatpush1.msra.mxu0 %v651
    %725 = vmatprep.subr.mxu0 %v654
    %726 = vmatpush1.msra.mxu0 %v653
    %727 = vmatprep.subr.mxu0 %v656
    %728 = vmatpush1.msra.mxu0 %v655
    %729 = vmatprep.subr.mxu0 %v658
    %730 = vmatpush1.msra.mxu0 %v657
    %731 = vmatprep.subr.mxu0 %v660
    %732 = vmatpush1.msra.mxu0 %v659
    %733 = vmatprep.subr.mxu0 %v662
    %734 = vmatpush1.msra.mxu0 %v661
    %735 = vmatprep.subr.mxu0 %v664
    %736 = vmatpush1.msra.mxu0 %v663
    %737 = vmatprep.subr.mxu0 %v666
    %738 = vmatpush1.msra.mxu0 %v665
    %739 = vmatprep.subr.mxu0 %v668
    %740 = vmatpush1.msra.mxu0 %v667
    %741 = vmatprep.subr.mxu0 %v670
    %742 = vmatpush1.msra.mxu0 %v669
    %743 = vmatprep.mubr.f32.mxu0 %v676
    %744 = vmatmul.mubr.f32.gmra.mrb[0].mxu0 %v675
    %v745 = vpop.f32.mrb[0].mxu0
    %v746 = vadd.f32 0.0, %v745
    %v747 = vpop.f32.mrb[0].mxu0
    %v748 = vadd.f32 0.0, %v747
    %749 = vdwg.mxu0
    %v754 = vsel %vm192, %v493, %v475
    %v755 = vsel %vm192, %v502, %v484
    %758 = vmatprep.subr.mxu0 %v544
    %759 = vmatpush1.msra.mxu0 %v543
    %760 = vmatprep.subr.mxu0 %v546
    %761 = vmatpush1.msra.mxu0 %v545
    %762 = vmatprep.subr.mxu0 %v548
    %763 = vmatpush1.msra.mxu0 %v547
    %764 = vmatprep.subr.mxu0 %v550
    %765 = vmatpush1.msra.mxu0 %v549
    %766 = vmatprep.subr.mxu0 %v552
    %767 = vmatpush1.msra.mxu0 %v551
    %768 = vmatprep.subr.mxu0 %v554
    %769 = vmatpush1.msra.mxu0 %v553
    %770 = vmatprep.subr.mxu0 %v556
    %771 = vmatpush1.msra.mxu0 %v555
    %772 = vmatprep.subr.mxu0 %v558
    %773 = vmatpush1.msra.mxu0 %v557
    %774 = vmatprep.subr.mxu0 %v560
    %775 = vmatpush1.msra.mxu0 %v559
    %776 = vmatprep.subr.mxu0 %v562
    %777 = vmatpush1.msra.mxu0 %v561
    %778 = vmatprep.subr.mxu0 %v564
    %779 = vmatpush1.msra.mxu0 %v563
    %780 = vmatprep.subr.mxu0 %v566
    %781 = vmatpush1.msra.mxu0 %v565
    %782 = vmatprep.subr.mxu0 %v568
    %783 = vmatpush1.msra.mxu0 %v567
    %784 = vmatprep.subr.mxu0 %v570
    %785 = vmatpush1.msra.mxu0 %v569
    %786 = vmatprep.subr.mxu0 %v572
    %787 = vmatpush1.msra.mxu0 %v571
    %788 = vmatprep.subr.mxu0 %v574
    %789 = vmatpush1.msra.mxu0 %v573
    %790 = vmatprep.subr.mxu0 %v576
    %791 = vmatpush1.msra.mxu0 %v575
    %792 = vmatprep.subr.mxu0 %v578
    %793 = vmatpush1.msra.mxu0 %v577
    %794 = vmatprep.subr.mxu0 %v580
    %795 = vmatpush1.msra.mxu0 %v579
    %796 = vmatprep.subr.mxu0 %v582
    %797 = vmatpush1.msra.mxu0 %v581
    %798 = vmatprep.subr.mxu0 %v584
    %799 = vmatpush1.msra.mxu0 %v583
    %800 = vmatprep.subr.mxu0 %v586
    %801 = vmatpush1.msra.mxu0 %v585
    %802 = vmatprep.subr.mxu0 %v588
    %803 = vmatpush1.msra.mxu0 %v587
    %804 = vmatprep.subr.mxu0 %v590
    %805 = vmatpush1.msra.mxu0 %v589
    %806 = vmatprep.subr.mxu0 %v592
    %807 = vmatpush1.msra.mxu0 %v591
    %808 = vmatprep.subr.mxu0 %v594
    %809 = vmatpush1.msra.mxu0 %v593
    %810 = vmatprep.subr.mxu0 %v596
    %811 = vmatpush1.msra.mxu0 %v595
    %812 = vmatprep.subr.mxu0 %v598
    %813 = vmatpush1.msra.mxu0 %v597
    %814 = vmatprep.subr.mxu0 %v600
    %815 = vmatpush1.msra.mxu0 %v599
    %816 = vmatprep.subr.mxu0 %v602
    %817 = vmatpush1.msra.mxu0 %v601
    %818 = vmatprep.subr.mxu0 %v604
    %819 = vmatpush1.msra.mxu0 %v603
    %820 = vmatprep.subr.mxu0 %v606
    %821 = vmatpush1.msra.mxu0 %v605
    %822 = vmatprep.mubr.f32.mxu0 %v755
    %823 = vmatmul.mubr.f32.gmra.mrb[0].mxu0 %v754
    %v824 = vpop.f32.mrb[0].mxu0
    %v825 = vadd.f32 %v746, %v824
    %v826 = vpop.f32.mrb[0].mxu0
    %v827 = vadd.f32 %v748, %v826
    %828 = vdwg.mxu0
    %s829 = sld [smem:[#allocation2]]
    %v830 = vstv %s829
    %v831 = vadd.f32 %v825, %v830
    %v832 = vadd.f32 %v827, %v830
    %v833 = vxor.u32 %v831, 2147483648
    %v834 = vxor.u32 %v832, 2147483648
    %v835 = vmul.f32 %v833, 1.442695
    %v836 = vpow.pop %v835
    %v837 = vmul.f32 %v834, 1.442695
    %v838 = vpow.pop %v837
    %v839 = vadd.f32 %v836, 1.0
    %v840 = vadd.f32 %v838, 1.0
    %v841 = vrcp.pop %v839
    %v842 = vmul.f32 1.0, %v841
    %v843 = vrcp.pop %v840
    %v844 = vmul.f32 1.0, %v843
    %v847 = vcombine.low %v842, %v844
    %v849 = vunpack.c.l.s4 1966171168
    %v850 = vunpack.c.0.s8 %v849
    %v851 = vlaneseq
    %v852 = vshrl.u32 %v851, 7
    %v853 = vsub.s32 %v850, %v852
    %v854 = vrot.slane %v847, %v853
    %v855 = vcombine.high %v854, %v854
    %v857 = vunpack.c.l.s4 1966171168
    %v858 = vunpack.c.0.s8 %v857
    %v859 = vlaneseq
    %v860 = vshrl.u32 %v859, 7
    %v861 = vsub.s32 %v858, %v860
    %v862 = vrot.slane %v854, %v861
    %v864 = vunpack.c.l.s4 1966171168
    %v865 = vunpack.c.0.s8 %v864
    %v866 = vlaneseq
    %v867 = vshrl.u32 %v866, 7
    %v868 = vsub.s32 %v865, %v867
    %v869 = vrot.slane %v855, %v868
    %v870 = vlaneseq
    %v871 = vshrl.u32 %v870, 7
    %v872 = vsub.s32 0, %v871
    %v873 = vrot.slane %v862, %v872
    %v874 = vlaneseq
    %v875 = vshrl.u32 %v874, 7
    %v876 = vsub.s32 1, %v875
    %v877 = vrot.slane %v862, %v876
    %v878 = vlaneseq
    %v879 = vshrl.u32 %v878, 7
    %v880 = vsub.s32 0, %v879
    %v881 = vrot.slane %v869, %v880
    %v882 = vlaneseq
    %v883 = vshrl.u32 %v882, 7
    %v884 = vsub.s32 1, %v883
    %v885 = vrot.slane %v869, %v884
    %v890 = vmul.f32 %v451, %v873
    %v891 = vmul.f32 %v452, %v877
    %v892 = vmul.f32 %v453, %v873
    %v893 = vmul.f32 %v454, %v877
    %v894 = vmul.f32 %v455, %v873
    %v895 = vmul.f32 %v456, %v877
    %v896 = vmul.f32 %v457, %v873
    %v897 = vmul.f32 %v458, %v877
    %v898 = vmul.f32 %v459, %v881
    %v899 = vmul.f32 %v460, %v885
    %v900 = vmul.f32 %v461, %v881
    %v901 = vmul.f32 %v462, %v885
    %v902 = vmul.f32 %v463, %v881
    %v903 = vmul.f32 %v464, %v885
    %v904 = vmul.f32 %v465, %v881
    %v905 = vmul.f32 %v466, %v885
    %v906 = vadd.f32 %v890, %v66
    %v907 = vadd.f32 %v891, %v67
    %v908 = vadd.f32 %v892, %v68
    %v909 = vadd.f32 %v893, %v69
    %v910 = vadd.f32 %v894, %v70
    %v911 = vadd.f32 %v895, %v71
    %v912 = vadd.f32 %v896, %v72
    %v913 = vadd.f32 %v897, %v73
    %v914 = vadd.f32 %v898, %v74
    %v915 = vadd.f32 %v899, %v75
    %v916 = vadd.f32 %v900, %v76
    %v917 = vadd.f32 %v901, %v77
    %v918 = vadd.f32 %v902, %v78
    %v919 = vadd.f32 %v903, %v79
    %v920 = vadd.f32 %v904, %v80
    %v921 = vadd.f32 %v905, %v81
    %922 = vst [vmem:[#allocation9] sm:$0xff] %v906
    %923 = vst [vmem:[#allocation9 + $0x8] sm:$0xff] %v907
    %924 = vst [vmem:[#allocation9 + $0x10] sm:$0xff] %v908
    %925 = vst [vmem:[#allocation9 + $0x18] sm:$0xff] %v909
    %926 = vst [vmem:[#allocation9 + $0x20] sm:$0xff] %v910
    %927 = vst [vmem:[#allocation9 + $0x28] sm:$0xff] %v911
    %928 = vst [vmem:[#allocation9 + $0x30] sm:$0xff] %v912
    %929 = vst [vmem:[#allocation9 + $0x38] sm:$0xff] %v913
    %930 = vst [vmem:[#allocation9 + $0x40] sm:$0xff] %v914
    %931 = vst [vmem:[#allocation9 + $0x48] sm:$0xff] %v915
    %932 = vst [vmem:[#allocation9 + $0x50] sm:$0xff] %v916
    %933 = vst [vmem:[#allocation9 + $0x58] sm:$0xff] %v917
    %934 = vst [vmem:[#allocation9 + $0x60] sm:$0xff] %v918
    %935 = vst [vmem:[#allocation9 + $0x68] sm:$0xff] %v919
    %936 = vst [vmem:[#allocation9 + $0x70] sm:$0xff] %v920
    %937 = vst [vmem:[#allocation9 + $0x78] sm:$0xff] %v921
    // Predicated region
    $region38: #{tpu_custom_call.1} parent=1 // pred_check
      _
    $region39: #{tpu_custom_call.1} parent=1 // pred_check_branch
      %939 = sbr.rel (0) target = $region41
    $region40: #{tpu_custom_call.1} parent=1 // pred_region
      %s941 = ssub.s32 2048, 2048
      %942 = vsyncadd [#allocation5], %s941
      %s943 = sshll.u32 [#allocation9], 4
      %s944 = int_to_ptr.vmem [resolvable:$true] %s943
      %949 = dma.vmem_to_hbm [thread:$0]  %s944, 2048, %s6, [#allocation5], 256, 256, 16
    $region41: #{tpu_custom_call.1} parent=1 // pred_fallthru
      _
    // Predicated region
    $region42: #{tpu_custom_call.1} parent=1 // pred_check
      _
    $region43: #{tpu_custom_call.1} parent=1 // pred_check_branch
      %951 = sbr.rel (0) target = $region45
    $region44: #{tpu_custom_call.1} parent=1 // pred_region
      %952 = dma.done [#allocation5], 2048
    $region45: #{tpu_custom_call.1} parent=1 // pred_fallthru
      _
    %953 = vsyncpa [#allocation4], 1
    %954 = vsyncpa [#allocation7], 1
    %955 = vsyncpa [#allocation5], 1

</llo_original>
